<compile_context>
chip_gen: v6e
topology: v6e:2x2x1
jax: 0.10.0
libtpu: 0.0.40
codegen_flags: <defaults>
</compile_context>

<pallas_src>
import functools

import jax
import jax.numpy as jnp
from jax import lax
from jax.experimental import pallas as pl
from jax.experimental.pallas import tpu as pltpu

LANE = 128


def _round_up(x, m):
    return ((x + m - 1) // m) * m


def _pick_block(total, preferred):
    """Largest divisor of `total` that is <= preferred (>=1)."""
    b = max(1, min(total, preferred))
    while total % b:
        b -= 1
    return b


def rnn_block_kernel(x_ref, h0_ref, w_x_ref, w_h_ref, w_ho_ref, b_ref,
                     out_ref, h_final_ref, h_carry_ref, hbuf_ref, *, tc, bb):
    """One grid step = Tc RNN timesteps for the current batch block."""
    tg = pl.program_id(1)

    # First time-block of this batch tile: load (padded) initial hidden state.
    @pl.when(tg == 0)
    def _():
        h_carry_ref[...] = h0_ref[...]

    # ---- parallel part, hoisted out of the recurrence ----------------------
    # x projection for all Tc steps in one MXU-efficient matmul (M = Tc*bb).
    x_flat = x_ref[...].reshape(tc * bb, x_ref.shape[-1])
    hbuf_ref[...] = jnp.dot(x_flat, w_x_ref[...],
                            preferred_element_type=jnp.float32)

    # ---- serial recurrence: h stays a register value ------------------------
    w_h = w_h_ref[...]

    def step(t, h):
        r = pl.multiple_of(t * bb, bb)
        pre = hbuf_ref[pl.ds(r, bb), :] + jnp.dot(
            h, w_h, preferred_element_type=jnp.float32)
        h_new = jnp.tanh(pre)
        hbuf_ref[pl.ds(r, bb), :] = h_new      # reuse buffer: xproj(t) -> h(t)
        return h_new

    h_last = lax.fori_loop(0, tc, step, h_carry_ref[...], unroll=True)
    h_carry_ref[...] = h_last                   # persists to the next time block
    h_final_ref[...] = h_last                   # written every block -> robust

    # ---- batched output projection (also outside the serial loop) ----------
    out = jnp.dot(hbuf_ref[...], w_ho_ref[...],
                  preferred_element_type=jnp.float32) + b_ref[...]
    out_ref[...] = out.reshape(tc, bb, out_ref.shape[-1])


def prepare_rnn_params(w_ih, w_ho, b_ho, input_size):
    """One-time weight layout work: split W_ih into x/h parts, transpose, pad."""
    hidden_size = w_ih.shape[0]
    output_size = w_ho.shape[0]
    hid_pad = _round_up(hidden_size, LANE)
    out_pad = _round_up(output_size, LANE)

    w_ih_t = jnp.asarray(w_ih, jnp.float32).T           # (input+hidden, hidden)

    w_x = jnp.zeros((input_size, hid_pad), jnp.float32)
    w_x = w_x.at[:, :hidden_size].set(w_ih_t[:input_size])

    w_h = jnp.zeros((hid_pad, hid_pad), jnp.float32)
    w_h = w_h.at[:hidden_size, :hidden_size].set(w_ih_t[input_size:])

    w_ho_p = jnp.zeros((hid_pad, out_pad), jnp.float32)
    w_ho_p = w_ho_p.at[:hidden_size, :output_size].set(
        jnp.asarray(w_ho, jnp.float32).T)

    b_p = jnp.zeros((1, out_pad), jnp.float32)
    b_p = b_p.at[0, :output_size].set(jnp.asarray(b_ho, jnp.float32))

    meta = dict(input_size=input_size, hidden_size=hidden_size,
                output_size=output_size, hid_pad=hid_pad, out_pad=out_pad)
    return (w_x, w_h, w_ho_p, b_p), meta


def custom_rnn_sequence(xs, h0, w_x, w_h, w_ho_p, b_p, *, input_size,
                        hidden_size, output_size, hid_pad, out_pad,
                        batch_block=None, time_block=16):
    """Run T RNN steps in a single pallas_call.

    xs: (T, B, input_size)   h0: (B, hidden_size)
    returns (outputs (T, B, output_size), final hidden (B, hidden_size))
    """
    T, B, _ = xs.shape

    bb = min(B, 128) if batch_block is None else batch_block
    assert B % bb == 0 and (bb == B or bb % 8 == 0), "batch block must tile B"
    nb = B // bb
    # TODO(synk): on v7x pick bb so that nb is a multiple of 2 (megacore) when
    # B is large enough; with the tiny demo batch nb=1 is unavoidable.

    tc = _pick_block(T, time_block)
    tg = T // tc

    # Pad the initial hidden state to 128 lanes (one cheap op per sequence).
    h0_p = jnp.zeros((B, hid_pad), jnp.float32).at[:, :hidden_size].set(h0)

    kernel = functools.partial(rnn_block_kernel, tc=tc, bb=bb)

    outputs_padded, h_final_padded = pl.pallas_call(
        kernel,
        out_shape=(
            jax.ShapeDtypeStruct((T, B, out_pad), jnp.float32),
            jax.ShapeDtypeStruct((B, hid_pad), jnp.float32),
        ),
        grid=(nb, tg),
        in_specs=[
            pl.BlockSpec((tc, bb, input_size), lambda b, t: (t, b, 0)),   # x block
            pl.BlockSpec((bb, hid_pad), lambda b, t: (b, 0)),             # h0
            pl.BlockSpec((input_size, hid_pad), lambda b, t: (0, 0)),     # W_x
            pl.BlockSpec((hid_pad, hid_pad), lambda b, t: (0, 0)),        # W_h
            pl.BlockSpec((hid_pad, out_pad), lambda b, t: (0, 0)),        # W_ho.T
            pl.BlockSpec((1, out_pad), lambda b, t: (0, 0)),              # b_ho
        ],
        out_specs=(
            pl.BlockSpec((tc, bb, out_pad), lambda b, t: (t, b, 0)),      # outputs
            pl.BlockSpec((bb, hid_pad), lambda b, t: (b, 0)),             # final h
        ),
        scratch_shapes=[
            pltpu.VMEM((bb, hid_pad), jnp.float32),       # resident hidden state
            pltpu.VMEM((tc * bb, hid_pad), jnp.float32),  # xproj(t) / h(t) buffer
        ],
        compiler_params=pltpu.CompilerParams(
            dimension_semantics=("parallel", "arbitrary")),
    )(xs, h0_p, w_x, w_h, w_ho_p, b_p)

    return (outputs_padded[:, :, :output_size],
            h_final_padded[:, :hidden_size])


def custom_rnn_forward(x, hidden_state, w_x, w_h, w_ho_p, b_p, **meta):
    """Single step -- exact semantics of CustomRNN.forward(x, hidden_state)."""
    outs, h_new = custom_rnn_sequence(x[None], hidden_state,
                                      w_x, w_h, w_ho_p, b_p, **meta)
    return outs[0], h_new


if __name__ == "__main__":
    batch = 8
    input_size = 16
    hidden_size = 32
    output_size = 8
    seq_len = 32          # 2 time blocks of Tc=16: exercises the carried state

    key = jax.random.PRNGKey(0)
    k_x, k_wih, k_who, k_bho, k_h = jax.random.split(key, 5)

    xs = jax.random.normal(k_x, (seq_len, batch, input_size), jnp.float32)
    w_ih = jax.random.normal(
        k_wih, (hidden_size, input_size + hidden_size), jnp.float32) * 0.1
    w_ho = jax.random.normal(
        k_who, (output_size, hidden_size), jnp.float32) * 0.1
    b_ho = jax.random.normal(k_bho, (output_size,), jnp.float32) * 0.1

    # One-time weight layout work (init-time, not per call).
    (w_x, w_h, w_ho_p, b_p), meta = prepare_rnn_params(w_ih, w_ho, b_ho,
                                                       input_size)

    # --- single-step check: matches the module's forward exactly -------------
    h_rand = jax.random.normal(k_h, (batch, hidden_size), jnp.float32)
    out1, h1 = custom_rnn_forward(xs[0], h_rand, w_x, w_h, w_ho_p, b_p, **meta)
    jax.block_until_ready((out1, h1))

    combined = jnp.concatenate([xs[0], h_rand], axis=1)
    h1_ref = jnp.tanh(combined @ w_ih.T)
    out1_ref = h1_ref @ w_ho.T + b_ho
    assert jnp.allclose(h1, h1_ref, atol=1e-3), "single-step hidden mismatch"
    assert jnp.allclose(out1, out1_ref, atol=1e-3), "single-step output mismatch"

    # --- fused sequence check: equals a driver loop over forward -------------
    h0 = jnp.zeros((batch, hidden_size), jnp.float32)   # init_hidden(batch)
    outs, h_final = custom_rnn_sequence(xs, h0, w_x, w_h, w_ho_p, b_p, **meta)
    jax.block_until_ready((outs, h_final))

    h = h0
    for t in range(seq_len):
        c = jnp.concatenate([xs[t], h], axis=1)
        h = jnp.tanh(c @ w_ih.T)
        o = h @ w_ho.T + b_ho
        assert jnp.allclose(outs[t], o, atol=1e-3), f"output mismatch at t={t}"
    assert jnp.allclose(h_final, h, atol=1e-3), "final hidden mismatch"

    print("KERNEL_OK")
</pallas_src>

<mosaic_0001>
module attributes {stable_mosaic.version = 11 : i64} {
  func.func @rnn_block_kernel(%arg0: i32, %arg1: i32, %arg2: memref<1x8x16xf32, #tpu.memory_space<vmem>>, %arg3: memref<8x128xf32, #tpu.memory_space<vmem>>, %arg4: memref<16x128xf32, #tpu.memory_space<vmem>>, %arg5: memref<128x128xf32, #tpu.memory_space<vmem>>, %arg6: memref<128x128xf32, #tpu.memory_space<vmem>>, %arg7: memref<1x128xf32, #tpu.memory_space<vmem>>, %arg8: memref<1x8x128xf32, #tpu.memory_space<vmem>>, %arg9: memref<8x128xf32, #tpu.memory_space<vmem>>, %arg10: memref<8x128xf32, #tpu.memory_space<vmem>>, %arg11: memref<8x128xf32, #tpu.memory_space<vmem>>) attributes {dimension_semantics = [#tpu.dimension_semantics<parallel>, #tpu.dimension_semantics<arbitrary>], iteration_bounds = array<i64: 1, 1>, scalar_prefetch = 0 : i64, scratch_operands = 2 : i64, tpu.core_type = #tpu.core_type<tc>, window_params = [{transform_indices = @transform_0, window_bounds = array<i64: 1, 8, 16>}, {transform_indices = @transform_1, window_bounds = array<i64: 8, 128>}, {pipeline_mode = #tpu.pipeline_mode<synchronous>, transform_indices = @transform_2, window_bounds = array<i64: 16, 128>}, {pipeline_mode = #tpu.pipeline_mode<synchronous>, transform_indices = @transform_3, window_bounds = array<i64: 128, 128>}, {pipeline_mode = #tpu.pipeline_mode<synchronous>, transform_indices = @transform_4, window_bounds = array<i64: 128, 128>}, {pipeline_mode = #tpu.pipeline_mode<synchronous>, transform_indices = @transform_5, window_bounds = array<i64: 1, 128>}, {transform_indices = @transform_6, window_bounds = array<i64: 1, 8, 128>}, {transform_indices = @transform_7, window_bounds = array<i64: 8, 128>}]} {
    %c0_i32 = arith.constant 0 : i32
    %0 = arith.cmpi eq, %arg1, %c0_i32 : i32
    %1 = arith.extui %0 : i1 to i32
    %c0_i32_0 = arith.constant 0 : i32
    %2 = arith.cmpi ne, %1, %c0_i32_0 : i32
    scf.if %2 {
      %c0_29 = arith.constant 0 : index
      %c0_30 = arith.constant 0 : index
      %29 = vector.load %arg3[%c0_29, %c0_30] : memref<8x128xf32, #tpu.memory_space<vmem>>, vector<8x128xf32>
      %c0_31 = arith.constant 0 : index
      %c0_32 = arith.constant 0 : index
      %30 = vector.load %arg10[%c0_31, %c0_32] : memref<8x128xf32, #tpu.memory_space<vmem>>, vector<8x128xf32>
      tpu.vector_store %arg10[%c0_31, %c0_32], %29 {strides = array<i32>} : memref<8x128xf32, #tpu.memory_space<vmem>>, vector<8x128xf32>,
    } else {
    }
    %c0 = arith.constant 0 : index
    %c0_1 = arith.constant 0 : index
    %c0_2 = arith.constant 0 : index
    %3 = vector.load %arg2[%c0, %c0_1, %c0_2] : memref<1x8x16xf32, #tpu.memory_space<vmem>>, vector<1x8x16xf32>
    %4 = vector.shape_cast %3 : vector<1x8x16xf32> to vector<8x16xf32>
    %c0_3 = arith.constant 0 : index
    %c0_4 = arith.constant 0 : index
    %5 = vector.load %arg4[%c0_3, %c0_4] : memref<16x128xf32, #tpu.memory_space<vmem>>, vector<16x128xf32>
    %cst = arith.constant dense<0.000000e+00> : vector<8x128xf32>
    %6 = tpu.matmul %4, %5, %cst {dimension_numbers = #tpu.dot_dimension_numbers<[1], [0], [0], [1], [0, 0, 1, 1], [], []>} : vector<8x16xf32>, vector<16x128xf32>, vector<8x128xf32> -> vector<8x128xf32>
    %c0_5 = arith.constant 0 : index
    %c0_6 = arith.constant 0 : index
    %7 = vector.load %arg11[%c0_5, %c0_6] : memref<8x128xf32, #tpu.memory_space<vmem>>, vector<8x128xf32>
    tpu.vector_store %arg11[%c0_5, %c0_6], %6 {strides = array<i32>} : memref<8x128xf32, #tpu.memory_space<vmem>>, vector<8x128xf32>,
    %c0_7 = arith.constant 0 : index
    %c0_8 = arith.constant 0 : index
    %8 = vector.load %arg5[%c0_7, %c0_8] : memref<128x128xf32, #tpu.memory_space<vmem>>, vector<128x128xf32>
    %c0_9 = arith.constant 0 : index
    %c0_10 = arith.constant 0 : index
    %9 = vector.load %arg10[%c0_9, %c0_10] : memref<8x128xf32, #tpu.memory_space<vmem>>, vector<8x128xf32>
    %c0_i32_11 = arith.constant 0 : i32
    %c8_i32 = arith.constant 8 : i32
    %10 = arith.muli %c0_i32_11, %c8_i32 : i32
    %11 = tpu.assume_multiple %10, 8 : i32
    %12 = arith.index_cast %11 : i32 to index
    %c0_12 = arith.constant 0 : index
    %13 = vector.load %arg11[%12, %c0_12] : memref<8x128xf32, #tpu.memory_space<vmem>>, vector<8x128xf32>
    %cst_13 = arith.constant dense<0.000000e+00> : vector<8x128xf32>
    %14 = tpu.matmul %9, %8, %cst_13 {dimension_numbers = #tpu.dot_dimension_numbers<[1], [0], [0], [1], [0, 0, 1, 1], [], []>} : vector<8x128xf32>, vector<128x128xf32>, vector<8x128xf32> -> vector<8x128xf32>
    %15 = arith.addf %13, %14 : vector<8x128xf32>
    %16 = math.tanh %15 : vector<8x128xf32>
    %17 = arith.index_cast %11 : i32 to index
    %c0_14 = arith.constant 0 : index
    %18 = vector.load %arg11[%17, %c0_14] : memref<8x128xf32, #tpu.memory_space<vmem>>, vector<8x128xf32>
    tpu.vector_store %arg11[%17, %c0_14], %16 {strides = array<i32>} : memref<8x128xf32, #tpu.memory_space<vmem>>, vector<8x128xf32>,
    %c1_i32 = arith.constant 1 : i32
    %c0_15 = arith.constant 0 : index
    %c0_16 = arith.constant 0 : index
    %19 = vector.load %arg10[%c0_15, %c0_16] : memref<8x128xf32, #tpu.memory_space<vmem>>, vector<8x128xf32>
    tpu.vector_store %arg10[%c0_15, %c0_16], %16 {strides = array<i32>} : memref<8x128xf32, #tpu.memory_space<vmem>>, vector<8x128xf32>,
    %c0_17 = arith.constant 0 : index
    %c0_18 = arith.constant 0 : index
    %20 = vector.load %arg9[%c0_17, %c0_18] : memref<8x128xf32, #tpu.memory_space<vmem>>, vector<8x128xf32>
    tpu.vector_store %arg9[%c0_17, %c0_18], %16 {strides = array<i32>} : memref<8x128xf32, #tpu.memory_space<vmem>>, vector<8x128xf32>,
    %c0_19 = arith.constant 0 : index
    %c0_20 = arith.constant 0 : index
    %21 = vector.load %arg11[%c0_19, %c0_20] : memref<8x128xf32, #tpu.memory_space<vmem>>, vector<8x128xf32>
    %c0_21 = arith.constant 0 : index
    %c0_22 = arith.constant 0 : index
    %22 = vector.load %arg6[%c0_21, %c0_22] : memref<128x128xf32, #tpu.memory_space<vmem>>, vector<128x128xf32>
    %cst_23 = arith.constant dense<0.000000e+00> : vector<8x128xf32>
    %23 = tpu.matmul %21, %22, %cst_23 {dimension_numbers = #tpu.dot_dimension_numbers<[1], [0], [0], [1], [0, 0, 1, 1], [], []>} : vector<8x128xf32>, vector<128x128xf32>, vector<8x128xf32> -> vector<8x128xf32>
    %c0_24 = arith.constant 0 : index
    %c0_25 = arith.constant 0 : index
    %24 = vector.load %arg7[%c0_24, %c0_25] : memref<1x128xf32, #tpu.memory_space<vmem>>, vector<1x128xf32>
    %25 = vector.broadcast %24 : vector<1x128xf32> to vector<8x128xf32>
    %26 = arith.addf %23, %25 : vector<8x128xf32>
    %27 = vector.shape_cast %26 : vector<8x128xf32> to vector<1x8x128xf32>
    %c0_26 = arith.constant 0 : index
    %c0_27 = arith.constant 0 : index
    %c0_28 = arith.constant 0 : index
    %28 = vector.load %arg8[%c0_26, %c0_27, %c0_28] : memref<1x8x128xf32, #tpu.memory_space<vmem>>, vector<1x8x128xf32>
    tpu.vector_store %arg8[%c0_26, %c0_27, %c0_28], %27 {strides = array<i32>} : memref<1x8x128xf32, #tpu.memory_space<vmem>>, vector<1x8x128xf32>,
    return
  }
  func.func @transform_0(%arg0: i32, %arg1: i32) -> (i32, i32, i32) {
    %c0_i32 = arith.constant 0 : i32
    %c0_i32_0 = arith.constant 0 : i32
    return %arg1, %arg0, %c0_i32 : i32, i32, i32
  }
  func.func @transform_1(%arg0: i32, %arg1: i32) -> (i32, i32) {
    %c0_i32 = arith.constant 0 : i32
    %c0_i32_0 = arith.constant 0 : i32
    return %arg0, %c0_i32 : i32, i32
  }
  func.func @transform_2(%arg0: i32, %arg1: i32) -> (i32, i32) {
    %c0_i32 = arith.constant 0 : i32
    %c0_i32_0 = arith.constant 0 : i32
    %c0_i32_1 = arith.constant 0 : i32
    return %c0_i32, %c0_i32_0 : i32, i32
  }
  func.func @transform_3(%arg0: i32, %arg1: i32) -> (i32, i32) {
    %c0_i32 = arith.constant 0 : i32
    %c0_i32_0 = arith.constant 0 : i32
    %c0_i32_1 = arith.constant 0 : i32
    return %c0_i32, %c0_i32_0 : i32, i32
  }
  func.func @transform_4(%arg0: i32, %arg1: i32) -> (i32, i32) {
    %c0_i32 = arith.constant 0 : i32
    %c0_i32_0 = arith.constant 0 : i32
    %c0_i32_1 = arith.constant 0 : i32
    return %c0_i32, %c0_i32_0 : i32, i32
  }
  func.func @transform_5(%arg0: i32, %arg1: i32) -> (i32, i32) {
    %c0_i32 = arith.constant 0 : i32
    %c0_i32_0 = arith.constant 0 : i32
    %c0_i32_1 = arith.constant 0 : i32
    return %c0_i32, %c0_i32_0 : i32, i32
  }
  func.func @transform_6(%arg0: i32, %arg1: i32) -> (i32, i32, i32) {
    %c0_i32 = arith.constant 0 : i32
    %c0_i32_0 = arith.constant 0 : i32
    return %arg1, %arg0, %c0_i32 : i32, i32, i32
  }
  func.func @transform_7(%arg0: i32, %arg1: i32) -> (i32, i32) {
    %c0_i32 = arith.constant 0 : i32
    %c0_i32_0 = arith.constant 0 : i32
    return %arg0, %c0_i32 : i32, i32
  }
}

</mosaic_0001>

<llo_original>
// kernel: tpu_custom_call.1
$region0: #{tpu_custom_call.1}
  #allocation0 [shape = 'u32[]', space=smem, size = 0x4, offset = 0x4, fixed_abs, tag = 'smem constant byte address 0x4 - core index']
  #allocation1 [shape = 'u32[144,128]{1,0:T(1,128)}', space=vmem, size = 0x12000, scoped, tag = 'internal scratch']
  #allocation2 [shape = 'f32[8,128]{1,0:T(8,128)}', space=vmem, size = 0x1000, scoped, tag = 'scratch operand']
  #allocation3 [shape = 'f32[8,128]{1,0:T(8,128)}', space=vmem, size = 0x1000, scoped, tag = 'scratch operand']
  %s0 = inlined_call_operand.hbm [shape: f32[1,8,16], index: 0, kind: input, shape index: {}]
  %s1 = inlined_call_operand.hbm [shape: f32[8,128], index: 1, kind: input, shape index: {}]
  %s2 = inlined_call_operand.hbm [shape: f32[16,128], index: 2, kind: input, shape index: {}]
  %s3 = inlined_call_operand.hbm [shape: f32[128,128], index: 3, kind: input, shape index: {}]
  %s4 = inlined_call_operand.hbm [shape: f32[128,128], index: 4, kind: input, shape index: {}]
  %s5 = inlined_call_operand.vmem [shape: f32[1,128], index: 5, kind: input, shape index: {}]
  %s6 = inlined_call_operand.hbm [shape: f32[1,8,128], index: 6, kind: output, shape index: {0}]
  %s7 = inlined_call_operand.hbm [shape: f32[8,128], index: 7, kind: output, shape index: {1}]
  %8 = xla_tuple %s6, %s7
  %s9 = sld [smem:[#allocation0]]
  $region66: #{tpu_custom_call.1} parent=0
    _
  %s11 = ssub.s32 1, %s9
  %s12 = scalar_select 0, %s11, %s9
  $region1: #{tpu_custom_call.1} parent=0
    #allocation4 [shape = 'u8[4096]{0}', space=vmem, size = 0x1000, scoped, tag = 'input window, operand 0, single buffered']
    #allocation5 [shape = 's32[1]{0}', space=sflag, size = 0x4, scoped, tag = 'scoped memory for tpu_custom_call.1']
    #allocation6 [shape = 's32[1]{0}', space=sflag, size = 0x4, scoped, tag = 'scoped memory for tpu_custom_call.1']
    #allocation7 [shape = 'u8[4096]{0}', space=vmem, size = 0x1000, scoped, tag = 'input window, operand 1, single buffered']
    #allocation8 [shape = 's32[1]{0}', space=sflag, size = 0x4, scoped, tag = 'scoped memory for tpu_custom_call.1']
    #allocation9 [shape = 'u8[8192]{0}', space=vmem, size = 0x2000, scoped, tag = 'input window, operand 2, single buffered']
    #allocation10 [shape = 'u8[65536]{0}', space=vmem, size = 0x10000, scoped, tag = 'input window, operand 3, single buffered']
    #allocation11 [shape = 's32[1]{0}', space=sflag, size = 0x4, scoped, tag = 'scoped memory for tpu_custom_call.1']
    #allocation12 [shape = 'u8[65536]{0}', space=vmem, size = 0x10000, scoped, tag = 'input window, operand 4, single buffered']
    #allocation13 [shape = 'u8[4096]{0}', space=vmem, size = 0x1000, scoped, tag = 'output window, operand 0, single buffered']
    #allocation14 [shape = 'u8[4096]{0}', space=vmem, size = 0x1000, scoped, tag = 'output window, operand 1, single buffered']
    #allocation15 [shape = 's32[1]{0}', space=sflag, size = 0x4, scoped, tag = 'scoped memory for tpu_custom_call.1']
    %13 = vsyncpa [#allocation5], 0
    %14 = vsyncpa [#allocation8], 0
    %15 = vsyncpa [#allocation11], 0
    %16 = vsyncpa [#allocation6], 0
    %17 = vsyncpa [#allocation15], 0
    // Predicated region
    $region2: #{tpu_custom_call.1} parent=1 // pred_check
      _
    $region3: #{tpu_custom_call.1} parent=1 // pred_check_branch
      %19 = sbr.rel (0) target = $region5
    $region4: #{tpu_custom_call.1} parent=1 // pred_region
      %s21 = ssub.s32 128, 128
      %22 = vsyncadd [#allocation5], %s21
      %s24 = sshll.u32 [#allocation4], 4
      %s25 = int_to_ptr.vmem [resolvable:$true] %s24
      %27 = dma.hbm_to_vmem [thread:$0]  %s0, 128, %s25, [#allocation5]
    $region5: #{tpu_custom_call.1} parent=1 // pred_fallthru
      _
    // Predicated region
    $region6: #{tpu_custom_call.1} parent=1 // pred_check
      _
    $region7: #{tpu_custom_call.1} parent=1 // pred_check_branch
      %29 = sbr.rel (0) target = $region9
    $region8: #{tpu_custom_call.1} parent=1 // pred_region
      %s31 = ssub.s32 128, 128
      %32 = vsyncadd [#allocation8], %s31
      %s34 = sshll.u32 [#allocation7], 4
      %s35 = int_to_ptr.vmem [resolvable:$true] %s34
      %37 = dma.hbm_to_vmem [thread:$0]  %s1, 128, %s35, [#allocation8]
    $region9: #{tpu_custom_call.1} parent=1 // pred_fallthru
      _
    // Predicated region
    $region10: #{tpu_custom_call.1} parent=1 // pred_check
      _
    $region11: #{tpu_custom_call.1} parent=1 // pred_check_branch
      %39 = sbr.rel (0) target = $region13
    $region12: #{tpu_custom_call.1} parent=1 // pred_region
      %s41 = ssub.s32 256, 256
      %42 = vsyncadd [#allocation8], %s41
      %s43 = sshll.u32 [#allocation9], 4
      %s44 = int_to_ptr.vmem [resolvable:$true] %s43
      %49 = dma.hbm_to_vmem [thread:$0]  %s2, 256, %s44, [#allocation8], 128, 128, 8
    $region13: #{tpu_custom_call.1} parent=1 // pred_fallthru
      _
    // Predicated region
    $region14: #{tpu_custom_call.1} parent=1 // pred_check
      _
    $region15: #{tpu_custom_call.1} parent=1 // pred_check_branch
      %51 = sbr.rel (0) target = $region17
    $region16: #{tpu_custom_call.1} parent=1 // pred_region
      %s53 = ssub.s32 2048, 2048
      %54 = vsyncadd [#allocation11], %s53
      %s55 = sshll.u32 [#allocation10], 4
      %s56 = int_to_ptr.vmem [resolvable:$true] %s55
      %61 = dma.hbm_to_vmem [thread:$0]  %s3, 2048, %s56, [#allocation11], 128, 128, 8
    $region17: #{tpu_custom_call.1} parent=1 // pred_fallthru
      _
    // Predicated region
    $region18: #{tpu_custom_call.1} parent=1 // pred_check
      _
    $region19: #{tpu_custom_call.1} parent=1 // pred_check_branch
      %63 = sbr.rel (0) target = $region21
    $region20: #{tpu_custom_call.1} parent=1 // pred_region
      %s65 = ssub.s32 2048, 2048
      %66 = vsyncadd [#allocation11], %s65
      %s67 = sshll.u32 [#allocation12], 4
      %s68 = int_to_ptr.vmem [resolvable:$true] %s67
      %73 = dma.hbm_to_vmem [thread:$0]  %s4, 2048, %s68, [#allocation11], 128, 128, 8
    $region21: #{tpu_custom_call.1} parent=1 // pred_fallthru
      _
    // Predicated region
    $region22: #{tpu_custom_call.1} parent=1 // pred_check
      _
    $region23: #{tpu_custom_call.1} parent=1 // pred_check_branch
      %75 = sbr.rel (0) target = $region25
    $region24: #{tpu_custom_call.1} parent=1 // pred_region
      _
    $region25: #{tpu_custom_call.1} parent=1 // pred_fallthru
      _
    // Predicated region
    $region26: #{tpu_custom_call.1} parent=1 // pred_check
      _
    $region27: #{tpu_custom_call.1} parent=1 // pred_check_branch
      %77 = sbr.rel (0) target = $region29
    $region28: #{tpu_custom_call.1} parent=1 // pred_region
      %78 = dma.done [#allocation5], 128
    $region29: #{tpu_custom_call.1} parent=1 // pred_fallthru
      _
    // Predicated region
    $region30: #{tpu_custom_call.1} parent=1 // pred_check
      _
    $region31: #{tpu_custom_call.1} parent=1 // pred_check_branch
      %80 = sbr.rel (0) target = $region33
    $region32: #{tpu_custom_call.1} parent=1 // pred_region
      %81 = dma.done [#allocation8], 128
    $region33: #{tpu_custom_call.1} parent=1 // pred_fallthru
      _
    // Predicated region
    $region34: #{tpu_custom_call.1} parent=1 // pred_check
      _
    $region35: #{tpu_custom_call.1} parent=1 // pred_check_branch
      %83 = sbr.rel (0) target = $region37
    $region36: #{tpu_custom_call.1} parent=1 // pred_region
      %84 = dma.done [#allocation8], 256
    $region37: #{tpu_custom_call.1} parent=1 // pred_fallthru
      _
    // Predicated region
    $region38: #{tpu_custom_call.1} parent=1 // pred_check
      _
    $region39: #{tpu_custom_call.1} parent=1 // pred_check_branch
      %86 = sbr.rel (0) target = $region41
    $region40: #{tpu_custom_call.1} parent=1 // pred_region
      %87 = dma.done [#allocation11], 2048
    $region41: #{tpu_custom_call.1} parent=1 // pred_fallthru
      _
    // Predicated region
    $region42: #{tpu_custom_call.1} parent=1 // pred_check
      _
    $region43: #{tpu_custom_call.1} parent=1 // pred_check_branch
      %89 = sbr.rel (0) target = $region45
    $region44: #{tpu_custom_call.1} parent=1 // pred_region
      %90 = dma.done [#allocation11], 2048
    $region45: #{tpu_custom_call.1} parent=1 // pred_fallthru
      _
    %p91 = scmp.eq.s32.totalorder 0, 0
    // Predicated region
    $region46: #{tpu_custom_call.1} parent=1 // pred_check
      %p92 = pneg %p91
    $region47: #{tpu_custom_call.1} parent=1 // pred_check_branch
      %94 = sbr.rel (%p92) target = $region49
    $region48: #{tpu_custom_call.1} parent=1 // pred_region
      %v95 = vld [vmem:[#allocation7] sm:$0xff]
      %96 = vst [vmem:[#allocation2] sm:$0xff] %v95
    $region49: #{tpu_custom_call.1} parent=1 // pred_fallthru
      _
    %v97 = vld [vmem:[#allocation4] sm:$0xff]
    %v98 = vld [vmem:[#allocation9] sm:$0xff]
    %v99 = vld [vmem:[#allocation9 + $0x8] sm:$0xff]
    %vm100 = vcmask 130048
    %v102 = vsel %vm100, %v97, 0
    %104 = vmatprep.subr.mxu0 0.0
    %105 = vmatpush1.msra.mxu0 0.0
    %106 = vmatprep.subr.mxu0 0.0
    %107 = vmatpush1.msra.mxu0 0.0
    %108 = vmatprep.subr.mxu0 0.0
    %109 = vmatpush1.msra.mxu0 0.0
    %110 = vmatprep.subr.mxu0 0.0
    %111 = vmatpush1.msra.mxu0 0.0
    %112 = vmatprep.subr.mxu0 0.0
    %113 = vmatpush1.msra.mxu0 0.0
    %114 = vmatprep.subr.mxu0 0.0
    %115 = vmatpush1.msra.mxu0 0.0
    %116 = vmatprep.subr.mxu0 0.0
    %117 = vmatpush1.msra.mxu0 0.0
    %118 = vmatprep.subr.mxu0 0.0
    %119 = vmatpush1.msra.mxu0 0.0
    %120 = vmatprep.subr.mxu0 0.0
    %121 = vmatpush1.msra.mxu0 0.0
    %122 = vmatprep.subr.mxu0 0.0
    %123 = vmatpush1.msra.mxu0 0.0
    %124 = vmatprep.subr.mxu0 0.0
    %125 = vmatpush1.msra.mxu0 0.0
    %126 = vmatprep.subr.mxu0 0.0
    %127 = vmatpush1.msra.mxu0 0.0
    %128 = vmatprep.subr.mxu0 0.0
    %129 = vmatpush1.msra.mxu0 0.0
    %130 = vmatprep.subr.mxu0 0.0
    %131 = vmatpush1.msra.mxu0 0.0
    %132 = vmatprep.subr.mxu0 0.0
    %133 = vmatpush1.msra.mxu0 %v99
    %134 = vmatprep.subr.mxu0 0.0
    %135 = vmatpush1.msra.mxu0 %v98
    %136 = vmatprep.subr.mxu0 0.0
    %137 = vmatpush2.msra.mxu0 0.0
    %138 = vmatprep.subr.mxu0 0.0
    %139 = vmatpush2.msra.mxu0 0.0
    %140 = vmatprep.subr.mxu0 0.0
    %141 = vmatpush2.msra.mxu0 0.0
    %142 = vmatprep.subr.mxu0 0.0
    %143 = vmatpush2.msra.mxu0 0.0
    %144 = vmatprep.subr.mxu0 0.0
    %145 = vmatpush2.msra.mxu0 0.0
    %146 = vmatprep.subr.mxu0 0.0
    %147 = vmatpush2.msra.mxu0 0.0
    %148 = vmatprep.subr.mxu0 0.0
    %149 = vmatpush2.msra.mxu0 0.0
    %150 = vmatprep.subr.mxu0 0.0
    %151 = vmatpush2.msra.mxu0 0.0
    %152 = vmatprep.subr.mxu0 0.0
    %153 = vmatpush2.msra.mxu0 0.0
    %154 = vmatprep.subr.mxu0 0.0
    %155 = vmatpush2.msra.mxu0 0.0
    %156 = vmatprep.subr.mxu0 0.0
    %157 = vmatpush2.msra.mxu0 0.0
    %158 = vmatprep.subr.mxu0 0.0
    %159 = vmatpush2.msra.mxu0 0.0
    %160 = vmatprep.subr.mxu0 0.0
    %161 = vmatpush2.msra.mxu0 0.0
    %162 = vmatprep.subr.mxu0 0.0
    %163 = vmatpush2.msra.mxu0 0.0
    %164 = vmatprep.subr.mxu0 0.0
    %165 = vmatpush2.msra.mxu0 0.0
    %166 = vmatprep.subr.mxu0 0.0
    %167 = vmatpush2.msra.mxu0 0.0
    %168 = vmatprep.mubr.f32.mxu0 0.0
    %169 = vmatmul.mubr.f32.gmra.mxu0 %v102
    %v170 = vpop.f32.mrf.mxu0
    %v171 = vadd.f32 0.0, %v170
    %v172 = vpop.f32.mrf.mxu0
    %173 = vdwg.mxu0
    %174 = vst [vmem:[#allocation3] sm:$0xff] %v171
    %v175 = vld [vmem:[#allocation10] sm:$0xff]
    %v176 = vld [vmem:[#allocation10 + $0x8] sm:$0xff]
    %v177 = vld [vmem:[#allocation10 + $0x10] sm:$0xff]
    %v178 = vld [vmem:[#allocation10 + $0x18] sm:$0xff]
    %v179 = vld [vmem:[#allocation10 + $0x20] sm:$0xff]
    %v180 = vld [vmem:[#allocation10 + $0x28] sm:$0xff]
    %v181 = vld [vmem:[#allocation10 + $0x30] sm:$0xff]
    %v182 = vld [vmem:[#allocation10 + $0x38] sm:$0xff]
    %v183 = vld [vmem:[#allocation10 + $0x40] sm:$0xff]
    %v184 = vld [vmem:[#allocation10 + $0x48] sm:$0xff]
    %v185 = vld [vmem:[#allocation10 + $0x50] sm:$0xff]
    %v186 = vld [vmem:[#allocation10 + $0x58] sm:$0xff]
    %v187 = vld [vmem:[#allocation10 + $0x60] sm:$0xff]
    %v188 = vld [vmem:[#allocation10 + $0x68] sm:$0xff]
    %v189 = vld [vmem:[#allocation10 + $0x70] sm:$0xff]
    %v190 = vld [vmem:[#allocation10 + $0x78] sm:$0xff]
    %v191 = vld [vmem:[#allocation2] sm:$0xff]
    %v192 = vld [vmem:[#allocation3] sm:$0xff]
    %193 = vmatprep.subr.mxu0 0.0
    %194 = vmatpush1.msra.mxu0 %v190
    %195 = vmatprep.subr.mxu0 0.0
    %196 = vmatpush1.msra.mxu0 %v189
    %197 = vmatprep.subr.mxu0 0.0
    %198 = vmatpush1.msra.mxu0 %v188
    %199 = vmatprep.subr.mxu0 0.0
    %200 = vmatpush1.msra.mxu0 %v187
    %201 = vmatprep.subr.mxu0 0.0
    %202 = vmatpush1.msra.mxu0 %v186
    %203 = vmatprep.subr.mxu0 0.0
    %204 = vmatpush1.msra.mxu0 %v185
    %205 = vmatprep.subr.mxu0 0.0
    %206 = vmatpush1.msra.mxu0 %v184
    %207 = vmatprep.subr.mxu0 0.0
    %208 = vmatpush1.msra.mxu0 %v183
    %209 = vmatprep.subr.mxu0 0.0
    %210 = vmatpush1.msra.mxu0 %v182
    %211 = vmatprep.subr.mxu0 0.0
    %212 = vmatpush1.msra.mxu0 %v181
    %213 = vmatprep.subr.mxu0 0.0
    %214 = vmatpush1.msra.mxu0 %v180
    %215 = vmatprep.subr.mxu0 0.0
    %216 = vmatpush1.msra.mxu0 %v179
    %217 = vmatprep.subr.mxu0 0.0
    %218 = vmatpush1.msra.mxu0 %v178
    %219 = vmatprep.subr.mxu0 0.0
    %220 = vmatpush1.msra.mxu0 %v177
    %221 = vmatprep.subr.mxu0 0.0
    %222 = vmatpush1.msra.mxu0 %v176
    %223 = vmatprep.subr.mxu0 0.0
    %224 = vmatpush1.msra.mxu0 %v175
    %225 = vmatprep.subr.mxu0 0.0
    %226 = vmatpush2.msra.mxu0 0.0
    %227 = vmatprep.subr.mxu0 0.0
    %228 = vmatpush2.msra.mxu0 0.0
    %229 = vmatprep.subr.mxu0 0.0
    %230 = vmatpush2.msra.mxu0 0.0
    %231 = vmatprep.subr.mxu0 0.0
    %232 = vmatpush2.msra.mxu0 0.0
    %233 = vmatprep.subr.mxu0 0.0
    %234 = vmatpush2.msra.mxu0 0.0
    %235 = vmatprep.subr.mxu0 0.0
    %236 = vmatpush2.msra.mxu0 0.0
    %237 = vmatprep.subr.mxu0 0.0
    %238 = vmatpush2.msra.mxu0 0.0
    %239 = vmatprep.subr.mxu0 0.0
    %240 = vmatpush2.msra.mxu0 0.0
    %241 = vmatprep.subr.mxu0 0.0
    %242 = vmatpush2.msra.mxu0 0.0
    %243 = vmatprep.subr.mxu0 0.0
    %244 = vmatpush2.msra.mxu0 0.0
    %245 = vmatprep.subr.mxu0 0.0
    %246 = vmatpush2.msra.mxu0 0.0
    %247 = vmatprep.subr.mxu0 0.0
    %248 = vmatpush2.msra.mxu0 0.0
    %249 = vmatprep.subr.mxu0 0.0
    %250 = vmatpush2.msra.mxu0 0.0
    %251 = vmatprep.subr.mxu0 0.0
    %252 = vmatpush2.msra.mxu0 0.0
    %253 = vmatprep.subr.mxu0 0.0
    %254 = vmatpush2.msra.mxu0 0.0
    %255 = vmatprep.subr.mxu0 0.0
    %256 = vmatpush2.msra.mxu0 0.0
    %257 = vmatprep.mubr.f32.mxu0 0.0
    %258 = vmatmul.mubr.f32.gmra.mxu0 %v191
    %v259 = vpop.f32.mrf.mxu0
    %v260 = vadd.f32 0.0, %v259
    %v261 = vpop.f32.mrf.mxu0
    %262 = vdwg.mxu0
    %v263 = vadd.f32 %v192, %v260
    %v264 = vtanh.pop %v263
    %265 = vst [vmem:[#allocation3] sm:$0xff] %v264
    %266 = vst [vmem:[#allocation2] sm:$0xff] %v264
    %267 = vst [vmem:[#allocation14] sm:$0xff] %v264
    %v268 = vld [vmem:[#allocation3] sm:$0xff]
    %v269 = vld [vmem:[#allocation12] sm:$0xff]
    %v270 = vld [vmem:[#allocation12 + $0x8] sm:$0xff]
    %v271 = vld [vmem:[#allocation12 + $0x10] sm:$0xff]
    %v272 = vld [vmem:[#allocation12 + $0x18] sm:$0xff]
    %v273 = vld [vmem:[#allocation12 + $0x20] sm:$0xff]
    %v274 = vld [vmem:[#allocation12 + $0x28] sm:$0xff]
    %v275 = vld [vmem:[#allocation12 + $0x30] sm:$0xff]
    %v276 = vld [vmem:[#allocation12 + $0x38] sm:$0xff]
    %v277 = vld [vmem:[#allocation12 + $0x40] sm:$0xff]
    %v278 = vld [vmem:[#allocation12 + $0x48] sm:$0xff]
    %v279 = vld [vmem:[#allocation12 + $0x50] sm:$0xff]
    %v280 = vld [vmem:[#allocation12 + $0x58] sm:$0xff]
    %v281 = vld [vmem:[#allocation12 + $0x60] sm:$0xff]
    %v282 = vld [vmem:[#allocation12 + $0x68] sm:$0xff]
    %v283 = vld [vmem:[#allocation12 + $0x70] sm:$0xff]
    %v284 = vld [vmem:[#allocation12 + $0x78] sm:$0xff]
    %v285 = vld [vmem:[%s5] sm:$0x1]
    %v287 = vlaneseq
    %v288 = vshrl.u32 %v287, 7
    %v289 = vsub.s32 0, %v288
    %v290 = vrot.slane %v285, %v289
    %292 = vmatprep.subr.mxu0 0.0
    %293 = vmatpush1.msra.mxu0 %v284
    %294 = vmatprep.subr.mxu0 0.0
    %295 = vmatpush1.msra.mxu0 %v283
    %296 = vmatprep.subr.mxu0 0.0
    %297 = vmatpush1.msra.mxu0 %v282
    %298 = vmatprep.subr.mxu0 0.0
    %299 = vmatpush1.msra.mxu0 %v281
    %300 = vmatprep.subr.mxu0 0.0
    %301 = vmatpush1.msra.mxu0 %v280
    %302 = vmatprep.subr.mxu0 0.0
    %303 = vmatpush1.msra.mxu0 %v279
    %304 = vmatprep.subr.mxu0 0.0
    %305 = vmatpush1.msra.mxu0 %v278
    %306 = vmatprep.subr.mxu0 0.0
    %307 = vmatpush1.msra.mxu0 %v277
    %308 = vmatprep.subr.mxu0 0.0
    %309 = vmatpush1.msra.mxu0 %v276
    %310 = vmatprep.subr.mxu0 0.0
    %311 = vmatpush1.msra.mxu0 %v275
    %312 = vmatprep.subr.mxu0 0.0
    %313 = vmatpush1.msra.mxu0 %v274
    %314 = vmatprep.subr.mxu0 0.0
    %315 = vmatpush1.msra.mxu0 %v273
    %316 = vmatprep.subr.mxu0 0.0
    %317 = vmatpush1.msra.mxu0 %v272
    %318 = vmatprep.subr.mxu0 0.0
    %319 = vmatpush1.msra.mxu0 %v271
    %320 = vmatprep.subr.mxu0 0.0
    %321 = vmatpush1.msra.mxu0 %v270
    %322 = vmatprep.subr.mxu0 0.0
    %323 = vmatpush1.msra.mxu0 %v269
    %324 = vmatprep.subr.mxu0 0.0
    %325 = vmatpush2.msra.mxu0 0.0
    %326 = vmatprep.subr.mxu0 0.0
    %327 = vmatpush2.msra.mxu0 0.0
    %328 = vmatprep.subr.mxu0 0.0
    %329 = vmatpush2.msra.mxu0 0.0
    %330 = vmatprep.subr.mxu0 0.0
    %331 = vmatpush2.msra.mxu0 0.0
    %332 = vmatprep.subr.mxu0 0.0
    %333 = vmatpush2.msra.mxu0 0.0
    %334 = vmatprep.subr.mxu0 0.0
    %335 = vmatpush2.msra.mxu0 0.0
    %336 = vmatprep.subr.mxu0 0.0
    %337 = vmatpush2.msra.mxu0 0.0
    %338 = vmatprep.subr.mxu0 0.0
    %339 = vmatpush2.msra.mxu0 0.0
    %340 = vmatprep.subr.mxu0 0.0
    %341 = vmatpush2.msra.mxu0 0.0
    %342 = vmatprep.subr.mxu0 0.0
    %343 = vmatpush2.msra.mxu0 0.0
    %344 = vmatprep.subr.mxu0 0.0
    %345 = vmatpush2.msra.mxu0 0.0
    %346 = vmatprep.subr.mxu0 0.0
    %347 = vmatpush2.msra.mxu0 0.0
    %348 = vmatprep.subr.mxu0 0.0
    %349 = vmatpush2.msra.mxu0 0.0
    %350 = vmatprep.subr.mxu0 0.0
    %351 = vmatpush2.msra.mxu0 0.0
    %352 = vmatprep.subr.mxu0 0.0
    %353 = vmatpush2.msra.mxu0 0.0
    %354 = vmatprep.subr.mxu0 0.0
    %355 = vmatpush2.msra.mxu0 0.0
    %356 = vmatprep.mubr.f32.mxu0 0.0
    %357 = vmatmul.mubr.f32.gmra.mxu0 %v268
    %v358 = vpop.f32.mrf.mxu0
    %v359 = vadd.f32 %v290, %v358
    %v360 = vpop.f32.mrf.mxu0
    %361 = vdwg.mxu0
    %362 = vst [vmem:[#allocation13] sm:$0xff] %v359
    // Predicated region
    $region50: #{tpu_custom_call.1} parent=1 // pred_check
      _
    $region51: #{tpu_custom_call.1} parent=1 // pred_check_branch
      %364 = sbr.rel (0) target = $region53
    $region52: #{tpu_custom_call.1} parent=1 // pred_region
      %s366 = ssub.s32 128, 128
      %367 = vsyncadd [#allocation6], %s366
      %s369 = sshll.u32 [#allocation13], 4
      %s370 = int_to_ptr.vmem [resolvable:$true] %s369
      %372 = dma.vmem_to_hbm [thread:$0]  %s370, 128, %s6, [#allocation6]
    $region53: #{tpu_custom_call.1} parent=1 // pred_fallthru
      _
    // Predicated region
    $region54: #{tpu_custom_call.1} parent=1 // pred_check
      _
    $region55: #{tpu_custom_call.1} parent=1 // pred_check_branch
      %374 = sbr.rel (0) target = $region57
    $region56: #{tpu_custom_call.1} parent=1 // pred_region
      %s376 = ssub.s32 128, 128
      %377 = vsyncadd [#allocation15], %s376
      %s379 = sshll.u32 [#allocation14], 4
      %s380 = int_to_ptr.vmem [resolvable:$true] %s379
      %382 = dma.vmem_to_hbm [thread:$0]  %s380, 128, %s7, [#allocation15]
    $region57: #{tpu_custom_call.1} parent=1 // pred_fallthru
      _
    // Predicated region
    $region58: #{tpu_custom_call.1} parent=1 // pred_check
      _
    $region59: #{tpu_custom_call.1} parent=1 // pred_check_branch
      %384 = sbr.rel (0) target = $region61
    $region60: #{tpu_custom_call.1} parent=1 // pred_region
      %385 = dma.done [#allocation6], 128
    $region61: #{tpu_custom_call.1} parent=1 // pred_fallthru
      _
    // Predicated region
    $region62: #{tpu_custom_call.1} parent=1 // pred_check
      _
    $region63: #{tpu_custom_call.1} parent=1 // pred_check_branch
      %387 = sbr.rel (0) target = $region65
    $region64: #{tpu_custom_call.1} parent=1 // pred_region
      %388 = dma.done [#allocation15], 128
    $region65: #{tpu_custom_call.1} parent=1 // pred_fallthru
      _
    %389 = vsyncpa [#allocation5], 1
    %390 = vsyncpa [#allocation8], 1
    %391 = vsyncpa [#allocation11], 1
    %392 = vsyncpa [#allocation6], 1
    %393 = vsyncpa [#allocation15], 1

</llo_original>
